<compile_context>
chip_gen: v7x
topology: tpu7x:2x2x1
jax: 0.10.0
libtpu: 0.0.40
codegen_flags: <defaults>
</compile_context>

<pallas_src>
import jax
import jax.numpy as jnp
from jax.experimental import pallas as pl
from jax.experimental.pallas import tpu as pltpu

_LANE = 128          # lane width: last dim of every block must be a multiple of 128
_SUBLANE = 8         # sublane granularity for f32
_DEFAULT_TILE_ROWS = 512   # (512, 128) f32 tile = 256 KiB per buffer


def _linear1x1_kernel(wb_ref, x_ref, o_ref):
    """wb_ref: SMEM (2,) f32 holding [weight, bias]; x_ref/o_ref: VMEM tiles."""
    w = wb_ref[0]
    b = wb_ref[1]
    y = x_ref[...].astype(jnp.float32) * w + b   # single VPU multiply-add per vreg
    o_ref[...] = y.astype(o_ref.dtype)


def linear1x1(xs, weight, bias, *, tile_rows=_DEFAULT_TILE_ROWS, min_pallas_elems=128):
    """Equivalent of torch.nn.Linear(1, 1)(xs) for xs of shape (N, 1).

    weight: (1, 1), bias: (1,).  Returns (N, 1) with xs.dtype.
    """
    n, f = xs.shape
    assert f == 1, "Model expects last-dim feature size 1"
    assert tile_rows % _SUBLANE == 0, "tile_rows must be a multiple of 8"

    w = weight.reshape(()).astype(jnp.float32)
    b = bias.reshape(()).astype(jnp.float32)

    # Tiny inputs: kernel launch + per-step overhead dominates; do it in plain JAX.
    if n < min_pallas_elems:
        return (xs.astype(jnp.float32) * w + b).astype(xs.dtype)

    # ---- Lane-dense repacking: (N, 1) -> (rows_pad, 128) slab --------------
    rows = pl.cdiv(n, _LANE)
    rows_pad = ((rows + _SUBLANE - 1) // _SUBLANE) * _SUBLANE   # multiple of 8
    tr = min(tile_rows, rows_pad)
    n_tiles = pl.cdiv(rows_pad, tr)
    rows_pad = n_tiles * tr                                      # multiple of tr
    padded_elems = rows_pad * _LANE

    x_flat = xs.reshape(-1)
    x_slab = jnp.pad(x_flat, (0, padded_elems - n)).reshape(rows_pad, _LANE)

    wb = jnp.stack([w, b])   # (2,) f32 scalars, live in SMEM

    itemsize = jnp.dtype(xs.dtype).itemsize
    cost = pl.CostEstimate(
        flops=2 * padded_elems,
        transcendentals=0,
        bytes_accessed=2 * padded_elems * itemsize + 8,
    )

    out_slab = pl.pallas_call(
        _linear1x1_kernel,
        out_shape=jax.ShapeDtypeStruct((rows_pad, _LANE), xs.dtype),
        grid=(n_tiles,),
        in_specs=[
            pl.BlockSpec(memory_space=pltpu.SMEM),          # [w, b] scalars
            pl.BlockSpec((tr, _LANE), lambda i: (i, 0)),    # lane-dense input tile
        ],
        out_specs=pl.BlockSpec((tr, _LANE), lambda i: (i, 0)),
        compiler_params=pltpu.CompilerParams(
            dimension_semantics=("parallel",),              # shard tiles across TCs (v7x)
        ),
        cost_estimate=cost,
    )(wb, x_slab)

    return out_slab.reshape(-1)[:n].reshape(n, 1)


if __name__ == "__main__":
    key = jax.random.PRNGKey(0)
    kx, kw, kb = jax.random.split(key, 3)

    # Deterministic parameter init mimicking nn.Linear(1,1): U(-1, 1) since fan_in=1.
    weight = jax.random.uniform(kw, (1, 1), jnp.float32, minval=-1.0, maxval=1.0)
    bias = jax.random.uniform(kb, (1,), jnp.float32, minval=-1.0, maxval=1.0)

    # Batch of scalar features; deliberately not a multiple of 128 to exercise padding.
    n = 3000
    xs = jax.random.normal(kx, (n, 1), jnp.float32)
    ref = xs @ weight.T + bias

    # Default tile (single row-tile at this size).
    ys = jax.block_until_ready(linear1x1(xs, weight, bias))
    assert ys.shape == (n, 1)
    assert jnp.allclose(ys, ref, atol=1e-6), "mismatch vs reference (default tile)"

    # Multi-tile path: small row tile -> grid of 3 parallel steps.
    ys2 = jax.block_until_ready(linear1x1(xs, weight, bias, tile_rows=8))
    assert jnp.allclose(ys2, ref, atol=1e-6), "mismatch vs reference (tiled grid)"

    # Tiny-N fast path (pure JAX; Pallas launch overhead would dominate).
    xs_small = jax.random.normal(kx, (8, 1), jnp.float32)
    ys_small = jax.block_until_ready(linear1x1(xs_small, weight, bias))
    assert jnp.allclose(ys_small, xs_small @ weight.T + bias, atol=1e-6)

    print("KERNEL_OK")
</pallas_src>

<mosaic_0001>
module attributes {stable_mosaic.version = 11 : i64} {
  func.func @_linear1x1_kernel(%arg0: i32, %arg1: memref<2xf32, #tpu.memory_space<smem>>, %arg2: memref<24x128xf32, #tpu.memory_space<vmem>>, %arg3: memref<24x128xf32, #tpu.memory_space<vmem>>) attributes {dimension_semantics = [#tpu.dimension_semantics<parallel>], iteration_bounds = array<i64: 1>, scalar_prefetch = 0 : i64, scratch_operands = 0 : i64, tpu.core_type = #tpu.core_type<tc>, window_params = [{transform_indices = @transform_0, window_bounds = array<i64: 2>}, {transform_indices = @transform_1, window_bounds = array<i64: 24, 128>}, {transform_indices = @transform_2, window_bounds = array<i64: 24, 128>}]} {
    %c0 = arith.constant 0 : index
    %0 = memref.load %arg1[%c0] : memref<2xf32, #tpu.memory_space<smem>>
    %c1 = arith.constant 1 : index
    %1 = memref.load %arg1[%c1] : memref<2xf32, #tpu.memory_space<smem>>
    %c0_0 = arith.constant 0 : index
    %c0_1 = arith.constant 0 : index
    %2 = vector.load %arg2[%c0_0, %c0_1] : memref<24x128xf32, #tpu.memory_space<vmem>>, vector<24x128xf32>
    %3 = vector.broadcast %0 : f32 to vector<24x128xf32>
    %4 = arith.mulf %2, %3 : vector<24x128xf32>
    %5 = vector.broadcast %1 : f32 to vector<24x128xf32>
    %6 = arith.addf %4, %5 : vector<24x128xf32>
    %c0_2 = arith.constant 0 : index
    %c0_3 = arith.constant 0 : index
    %7 = vector.load %arg3[%c0_2, %c0_3] : memref<24x128xf32, #tpu.memory_space<vmem>>, vector<24x128xf32>
    tpu.vector_store %arg3[%c0_2, %c0_3], %6 {strides = array<i32>} : memref<24x128xf32, #tpu.memory_space<vmem>>, vector<24x128xf32>,
    return
  }
  func.func @transform_0(%arg0: i32) -> i32 {
    %c0_i32 = arith.constant 0 : i32
    %c0_i32_0 = arith.constant 0 : i32
    return %c0_i32 : i32
  }
  func.func @transform_1(%arg0: i32) -> (i32, i32) {
    %c0_i32 = arith.constant 0 : i32
    %c0_i32_0 = arith.constant 0 : i32
    return %arg0, %c0_i32 : i32, i32
  }
  func.func @transform_2(%arg0: i32) -> (i32, i32) {
    %c0_i32 = arith.constant 0 : i32
    %c0_i32_0 = arith.constant 0 : i32
    return %arg0, %c0_i32 : i32, i32
  }
}

</mosaic_0001>

<llo_original>
// kernel: tpu_custom_call.1
$region0: #{tpu_custom_call.1}
  #allocation0 [shape = 'u32[]', space=smem, size = 0x4, offset = 0x4, fixed_abs, tag = 'smem constant byte address 0x4 - core index']
  #allocation1 [shape = 'u32[144,128]{1,0:T(1,128)}', space=vmem, size = 0x12000, scoped, tag = 'internal scratch']
  %s0 = inlined_call_operand.hbm [shape: f32[2], index: 0, kind: input, shape index: {}]
  %s1 = inlined_call_operand.hbm [shape: f32[24,128], index: 1, kind: input, shape index: {}]
  %s2 = inlined_call_operand.hbm [shape: f32[24,128], index: 2, kind: output, shape index: {}]
  %s3 = sld [smem:[#allocation0]]
  $region26: #{tpu_custom_call.1} parent=0
    _
  %s5 = ssub.s32 1, %s3
  %s6 = scalar_select 0, %s5, %s3
  $region1: #{tpu_custom_call.1} parent=0
    #allocation2 [shape = 'u8[512]{0}', space=smem, size = 0x200, scoped, tag = 'input window, operand 0, single buffered']
    #allocation3 [shape = 's32[1]{0}', space=sflag, size = 0x4, scoped, tag = 'scoped memory for tpu_custom_call.1']
    #allocation4 [shape = 's32[1]{0}', space=sflag, size = 0x4, scoped, tag = 'scoped memory for tpu_custom_call.1']
    #allocation5 [shape = 's32[1]{0}', space=sflag, size = 0x4, scoped, tag = 'scoped memory for tpu_custom_call.1']
    #allocation6 [shape = 'u8[12288]{0}', space=vmem, size = 0x3000, scoped, tag = 'input window, operand 1, single buffered']
    #allocation7 [shape = 'u8[12288]{0}', space=vmem, size = 0x3000, scoped, tag = 'output window, operand 0, single buffered']
    %7 = vsyncpa [#allocation5], 0
    %8 = vsyncpa [#allocation3], 0
    %9 = vsyncpa [#allocation4], 0
    // Predicated region
    $region2: #{tpu_custom_call.1} parent=1 // pred_check
      _
    $region3: #{tpu_custom_call.1} parent=1 // pred_check_branch
      %11 = sbr.rel (0) target = $region5
    $region4: #{tpu_custom_call.1} parent=1 // pred_region
      %s13 = ssub.s32 16, 16
      %14 = vsyncadd [#allocation5], %s13
      %17 = dma.hbm_to_smem %s0, 16, [#allocation2], [#allocation5]
    $region5: #{tpu_custom_call.1} parent=1 // pred_fallthru
      _
    // Predicated region
    $region6: #{tpu_custom_call.1} parent=1 // pred_check
      _
    $region7: #{tpu_custom_call.1} parent=1 // pred_check_branch
      %19 = sbr.rel (0) target = $region9
    $region8: #{tpu_custom_call.1} parent=1 // pred_region
      %s21 = ssub.s32 384, 384
      %22 = vsyncadd [#allocation3], %s21
      %s23 = sshll.u32 [#allocation6], 4
      %s24 = int_to_ptr.vmem [resolvable:$true] %s23
      %29 = dma.hbm_to_vmem [thread:$0]  %s1, 384, %s24, [#allocation3], 128, 128, 8
    $region9: #{tpu_custom_call.1} parent=1 // pred_fallthru
      _
    // Predicated region
    $region10: #{tpu_custom_call.1} parent=1 // pred_check
      _
    $region11: #{tpu_custom_call.1} parent=1 // pred_check_branch
      %31 = sbr.rel (0) target = $region13
    $region12: #{tpu_custom_call.1} parent=1 // pred_region
      %32 = dma.done [#allocation5], 16
    $region13: #{tpu_custom_call.1} parent=1 // pred_fallthru
      _
    // Predicated region
    $region14: #{tpu_custom_call.1} parent=1 // pred_check
      _
    $region15: #{tpu_custom_call.1} parent=1 // pred_check_branch
      %34 = sbr.rel (0) target = $region17
    $region16: #{tpu_custom_call.1} parent=1 // pred_region
      %35 = dma.done [#allocation3], 384
    $region17: #{tpu_custom_call.1} parent=1 // pred_fallthru
      _
    %36 = sfence
    %s37 = sld [smem:[#allocation2]]
    %s38 = sld [smem:[#allocation2 + $0x1]]
    %v39 = vld [vmem:[#allocation6] sm:$0xff]
    %v40 = vld [vmem:[#allocation6 + $0x8] sm:$0xff]
    %v41 = vld [vmem:[#allocation6 + $0x10] sm:$0xff]
    %v42 = vstv %s37
    %v43 = vmul.f32 %v39, %v42
    %v44 = vmul.f32 %v40, %v42
    %v45 = vmul.f32 %v41, %v42
    %v46 = vstv %s38
    %v47 = vadd.f32 %v43, %v46
    %v48 = vadd.f32 %v44, %v46
    %v49 = vadd.f32 %v45, %v46
    %50 = vst [vmem:[#allocation7] sm:$0xff] %v47
    %51 = vst [vmem:[#allocation7 + $0x8] sm:$0xff] %v48
    %52 = vst [vmem:[#allocation7 + $0x10] sm:$0xff] %v49
    // Predicated region
    $region18: #{tpu_custom_call.1} parent=1 // pred_check
      _
    $region19: #{tpu_custom_call.1} parent=1 // pred_check_branch
      %54 = sbr.rel (0) target = $region21
    $region20: #{tpu_custom_call.1} parent=1 // pred_region
      %s56 = ssub.s32 384, 384
      %57 = vsyncadd [#allocation4], %s56
      %s58 = sshll.u32 [#allocation7], 4
      %s59 = int_to_ptr.vmem [resolvable:$true] %s58
      %64 = dma.vmem_to_hbm [thread:$0]  %s59, 384, %s2, [#allocation4], 128, 128, 8
    $region21: #{tpu_custom_call.1} parent=1 // pred_fallthru
      _
    // Predicated region
    $region22: #{tpu_custom_call.1} parent=1 // pred_check
      _
    $region23: #{tpu_custom_call.1} parent=1 // pred_check_branch
      %66 = sbr.rel (0) target = $region25
    $region24: #{tpu_custom_call.1} parent=1 // pred_region
      %67 = dma.done [#allocation4], 384
    $region25: #{tpu_custom_call.1} parent=1 // pred_fallthru
      _
    %68 = vsyncpa [#allocation3], 1
    %69 = vsyncpa [#allocation4], 1
    %70 = vsyncpa [#allocation5], 1

</llo_original>
